<compile_context>
chip_gen: v7x
topology: tpu7x:2x2x1
jax: 0.10.0
libtpu: 0.0.40
codegen_flags: <defaults>
</compile_context>

<pallas_src>
import functools

import jax
import jax.numpy as jnp
from jax import lax
from jax.experimental import pallas as pl
from jax.experimental.pallas import tpu as pltpu


def _ceil_div(a, b):
    return -(-a // b)


def _addcoords_kernel(x_ref, o_ref, *, C, n_extra, W, Lb, scale_h, scale_w):
    """One (batch, lane-tile) block per grid step.

    x_ref: (1, C,         Lb)  input block  (VMEM), lane axis = fused H*W
    o_ref: (1, C+n_extra, Lb)  output block (VMEM)
    """
    # 1) Pass-through of the original channels: one lane-dense store.
    o_ref[:, :C, :] = x_ref[...]

    # 2) Coordinate channels, generated in-register (no extra HBM traffic).
    base = pl.program_id(1) * Lb                                   # fused offset
    p = base + lax.broadcasted_iota(jnp.int32, (1, 1, Lb), 2)      # p = h*W + w
    # h = p // W, w = p % W via float division plus a one-step correction.
    # The correction makes the result exact for any realistic image size
    # (p < 2**31) without relying on integer-vector division lowering.
    h = ((p.astype(jnp.float32) + 0.5) / W).astype(jnp.int32)
    w = p - h * W
    h = jnp.where(w < 0, h - 1, jnp.where(w >= W, h + 1, h))
    w = jnp.where(w < 0, w + W, jnp.where(w >= W, w - W, w))

    xx = h.astype(jnp.float32) * scale_h - 1.0      # 2*h/(H-1) - 1 (varies along H)
    yy = w.astype(jnp.float32) * scale_w - 1.0      # 2*w/(W-1) - 1 (varies along W)

    # Fuse the 2-3 coordinate channels into a single (1, n_extra, Lb) store.
    ch = lax.broadcasted_iota(jnp.int32, (1, n_extra, Lb), 1)
    coords = jnp.where(ch == 0, xx, yy)
    if n_extra == 3:
        coords = jnp.where(ch == 2, jnp.sqrt(xx * xx + yy * yy), coords)
    o_ref[:, C:, :] = coords.astype(o_ref.dtype)


def _vmem_capacity_bytes():
    try:
        return int(pltpu.get_tpu_info().vmem_capacity_bytes)
    except Exception:
        return 64 * 1024 * 1024        # conservative: v7x per-TensorCore VMEM


def _pick_lane_block(L, N, bytes_per_lane, budget_bytes,
                     lane_cap=32768, min_grid_blocks=4):
    """Lane tile for the fused H*W axis: multiple of 128, or == L (full width)."""
    # Largest multiple of 128 that fits the per-step VMEM budget, capped to
    # bound in-kernel unrolling / instruction count.
    lb = max(128, (budget_bytes // max(1, bytes_per_lane)) // 128 * 128)
    lb = min(lb, lane_cap)
    if lb >= L:
        lb = L                          # single full-width block (== array dim is legal)
    # Guarantee several grid steps so both v7x TensorCores get work, but never
    # shrink below 512 lanes (lane-dense stores are the priority).
    if N * _ceil_div(L, lb) < min_grid_blocks and L > 512:
        want = _ceil_div(min_grid_blocks, N)
        lb_split = _ceil_div(_ceil_div(L, want), 128) * 128
        lb = max(min(lb, lb_split), 512)
        if lb >= L:
            lb = L
    return lb


def addcoords_forward(x_nchw, with_r=False):
    """AddCoords.forward for NCHW input -> (N, C + 2 (+1), H, W)."""
    N, C, H, W = x_nchw.shape
    n_extra = 3 if with_r else 2
    Cout = C + n_extra
    L = H * W
    itemsize = jnp.dtype(x_nchw.dtype).itemsize

    # Per-grid-step VMEM estimate: double-buffered in + out blocks, channel
    # axis padded to the dtype's sublane packing granularity.
    pack = max(8, 32 // itemsize)                   # f32: 8, bf16: 16, int8/fp8: 32
    c_in_pad = _ceil_div(C, pack) * pack
    c_out_pad = _ceil_div(Cout, pack) * pack
    bytes_per_lane = 2 * (c_in_pad + c_out_pad) * itemsize

    cap = _vmem_capacity_bytes()
    budget = cap // 3                               # leave headroom for pipelining
    Lb = _pick_lane_block(L, N, bytes_per_lane, budget)

    # Python-float scales -> one multiply per coord channel in the kernel.
    # H==1 / W==1 degenerates to NaN, matching the PyTorch module's 0/0.
    scale_h = (2.0 / (H - 1)) if H > 1 else float("inf")
    scale_w = (2.0 / (W - 1)) if W > 1 else float("inf")

    kernel = functools.partial(_addcoords_kernel, C=C, n_extra=n_extra, W=W,
                               Lb=Lb, scale_h=scale_h, scale_w=scale_w)

    x_flat = x_nchw.reshape(N, C, L)    # free: collapse of contiguous trailing dims
    out_flat = pl.pallas_call(
        kernel,
        out_shape=jax.ShapeDtypeStruct((N, Cout, L), x_nchw.dtype),
        grid_spec=pltpu.PrefetchScalarGridSpec(
            num_scalar_prefetch=0,
            grid=(N, _ceil_div(L, Lb)),             # ragged last block is masked
            in_specs=[pl.BlockSpec((1, C, Lb), lambda n, l: (n, 0, l))],
            out_specs=pl.BlockSpec((1, Cout, Lb), lambda n, l: (n, 0, l)),
        ),
        compiler_params=pltpu.CompilerParams(
            dimension_semantics=("parallel", "parallel"),
            vmem_limit_bytes=int(cap * 2 // 3)),
    )(x_flat)
    return out_flat.reshape(N, Cout, H, W)          # free: split of trailing dim


def addcoords_reference(x, with_r=False):
    """Pure-JAX reference matching the PyTorch AddCoords module."""
    N, C, H, W = x.shape
    xx = jnp.arange(H, dtype=jnp.float32) / (H - 1) * 2.0 - 1.0
    yy = jnp.arange(W, dtype=jnp.float32) / (W - 1) * 2.0 - 1.0
    xx = jnp.broadcast_to(xx[None, None, :, None], (N, 1, H, W))
    yy = jnp.broadcast_to(yy[None, None, None, :], (N, 1, H, W))
    ret = jnp.concatenate([x, xx.astype(x.dtype), yy.astype(x.dtype)], axis=1)
    if with_r:
        rr = jnp.sqrt(xx * xx + yy * yy)
        ret = jnp.concatenate([ret, rr.astype(x.dtype)], axis=1)
    return ret


if __name__ == "__main__":
    N, C, H, W = 2, 4, 16, 16
    key = jax.random.PRNGKey(0)
    x = jax.random.normal(key, (N, C, H, W), dtype=jnp.float32)

    for with_r in (False, True):
        out = jax.block_until_ready(addcoords_forward(x, with_r=with_r))
        ref = jax.block_until_ready(addcoords_reference(x, with_r=with_r))
        assert out.shape == (N, C + (3 if with_r else 2), H, W), out.shape
        assert jnp.allclose(out, ref, atol=1e-6, rtol=1e-6), \
            float(jnp.max(jnp.abs(out - ref)))

    print("KERNEL_OK")
</pallas_src>

<mosaic_0001>
module attributes {stable_mosaic.version = 11 : i64} {
  func.func @_addcoords_kernel(%arg0: i32, %arg1: i32, %arg2: memref<1x4x256xf32, #tpu.memory_space<vmem>>, %arg3: memref<1x6x256xf32, #tpu.memory_space<vmem>>) attributes {dimension_semantics = [#tpu.dimension_semantics<parallel>, #tpu.dimension_semantics<parallel>], iteration_bounds = array<i64: 2, 1>, scalar_prefetch = 0 : i64, scratch_operands = 0 : i64, tpu.core_type = #tpu.core_type<tc>, window_params = [{transform_indices = @transform_0, window_bounds = array<i64: 1, 4, 256>}, {transform_indices = @transform_1, window_bounds = array<i64: 1, 6, 256>}]} {
    %c0 = arith.constant 0 : index
    %c0_0 = arith.constant 0 : index
    %c0_1 = arith.constant 0 : index
    %0 = vector.load %arg2[%c0, %c0_0, %c0_1] : memref<1x4x256xf32, #tpu.memory_space<vmem>>, vector<1x4x256xf32>
    %c0_2 = arith.constant 0 : index
    %c0_3 = arith.constant 0 : index
    %c0_4 = arith.constant 0 : index
    %1 = vector.load %arg3[%c0_2, %c0_3, %c0_4] : memref<1x6x256xf32, #tpu.memory_space<vmem>>, vector<1x4x256xf32>
    tpu.vector_store %arg3[%c0_2, %c0_3, %c0_4], %0 {strides = array<i32>} : memref<1x6x256xf32, #tpu.memory_space<vmem>>, vector<1x4x256xf32>,
    %c256_i32 = arith.constant 256 : i32
    %2 = arith.muli %arg1, %c256_i32 : i32
    %3 = tpu.iota {dimensions = array<i32: 2>} : vector<1x1x256xi32>
    %4 = vector.broadcast %2 : i32 to vector<1x1x256xi32>
    %5 = arith.addi %4, %3 : vector<1x1x256xi32>
    %6 = arith.sitofp %5 : vector<1x1x256xi32> to vector<1x1x256xf32>
    %cst = arith.constant 5.000000e-01 : f32
    %7 = vector.broadcast %cst : f32 to vector<1x1x256xf32>
    %8 = arith.addf %6, %7 : vector<1x1x256xf32>
    %cst_5 = arith.constant 1.600000e+01 : f32
    %9 = vector.broadcast %cst_5 : f32 to vector<1x1x256xf32>
    %10 = arith.divf %8, %9 : vector<1x1x256xf32>
    %11 = arith.fptosi %10 : vector<1x1x256xf32> to vector<1x1x256xi32>
    %c16_i32 = arith.constant 16 : i32
    %12 = vector.broadcast %c16_i32 : i32 to vector<1x1x256xi32>
    %13 = arith.muli %11, %12 : vector<1x1x256xi32>
    %14 = arith.subi %5, %13 : vector<1x1x256xi32>
    %c0_i32 = arith.constant 0 : i32
    %15 = vector.broadcast %c0_i32 : i32 to vector<1x1x256xi32>
    %16 = arith.cmpi slt, %14, %15 : vector<1x1x256xi32>
    %c1_i32 = arith.constant 1 : i32
    %17 = vector.broadcast %c1_i32 : i32 to vector<1x1x256xi32>
    %18 = arith.subi %11, %17 : vector<1x1x256xi32>
    %c16_i32_6 = arith.constant 16 : i32
    %19 = vector.broadcast %c16_i32_6 : i32 to vector<1x1x256xi32>
    %20 = arith.cmpi sge, %14, %19 : vector<1x1x256xi32>
    %c1_i32_7 = arith.constant 1 : i32
    %21 = vector.broadcast %c1_i32_7 : i32 to vector<1x1x256xi32>
    %22 = arith.addi %11, %21 : vector<1x1x256xi32>
    %23 = arith.select %20, %22, %11 : vector<1x1x256xi1>, vector<1x1x256xi32>
    %24 = arith.select %16, %18, %23 : vector<1x1x256xi1>, vector<1x1x256xi32>
    %c0_i32_8 = arith.constant 0 : i32
    %25 = vector.broadcast %c0_i32_8 : i32 to vector<1x1x256xi32>
    %26 = arith.cmpi slt, %14, %25 : vector<1x1x256xi32>
    %c16_i32_9 = arith.constant 16 : i32
    %27 = vector.broadcast %c16_i32_9 : i32 to vector<1x1x256xi32>
    %28 = arith.addi %14, %27 : vector<1x1x256xi32>
    %c16_i32_10 = arith.constant 16 : i32
    %29 = vector.broadcast %c16_i32_10 : i32 to vector<1x1x256xi32>
    %30 = arith.cmpi sge, %14, %29 : vector<1x1x256xi32>
    %c16_i32_11 = arith.constant 16 : i32
    %31 = vector.broadcast %c16_i32_11 : i32 to vector<1x1x256xi32>
    %32 = arith.subi %14, %31 : vector<1x1x256xi32>
    %33 = arith.select %30, %32, %14 : vector<1x1x256xi1>, vector<1x1x256xi32>
    %34 = arith.select %26, %28, %33 : vector<1x1x256xi1>, vector<1x1x256xi32>
    %35 = arith.sitofp %24 : vector<1x1x256xi32> to vector<1x1x256xf32>
    %cst_12 = arith.constant 0.13333334 : f32
    %36 = vector.broadcast %cst_12 : f32 to vector<1x1x256xf32>
    %37 = arith.mulf %35, %36 : vector<1x1x256xf32>
    %cst_13 = arith.constant 1.000000e+00 : f32
    %38 = vector.broadcast %cst_13 : f32 to vector<1x1x256xf32>
    %39 = arith.subf %37, %38 : vector<1x1x256xf32>
    %40 = arith.sitofp %34 : vector<1x1x256xi32> to vector<1x1x256xf32>
    %cst_14 = arith.constant 0.13333334 : f32
    %41 = vector.broadcast %cst_14 : f32 to vector<1x1x256xf32>
    %42 = arith.mulf %40, %41 : vector<1x1x256xf32>
    %cst_15 = arith.constant 1.000000e+00 : f32
    %43 = vector.broadcast %cst_15 : f32 to vector<1x1x256xf32>
    %44 = arith.subf %42, %43 : vector<1x1x256xf32>
    %45 = tpu.iota {dimensions = array<i32: 1>} : vector<1x2x256xi32>
    %c0_i32_16 = arith.constant 0 : i32
    %46 = vector.broadcast %c0_i32_16 : i32 to vector<1x2x256xi32>
    %47 = arith.cmpi eq, %45, %46 : vector<1x2x256xi32>
    %48 = vector.shape_cast %39 : vector<1x1x256xf32> to vector<1x1x256xf32>
    %49 = vector.broadcast %48 : vector<1x1x256xf32> to vector<1x2x256xf32>
    %50 = vector.shape_cast %44 : vector<1x1x256xf32> to vector<1x1x256xf32>
    %51 = vector.broadcast %50 : vector<1x1x256xf32> to vector<1x2x256xf32>
    %52 = arith.select %47, %49, %51 : vector<1x2x256xi1>, vector<1x2x256xf32>
    %c0_17 = arith.constant 0 : index
    %c4 = arith.constant 4 : index
    %c0_18 = arith.constant 0 : index
    %53 = vector.load %arg3[%c0_17, %c4, %c0_18] : memref<1x6x256xf32, #tpu.memory_space<vmem>>, vector<1x2x256xf32>
    tpu.vector_store %arg3[%c0_17, %c4, %c0_18], %52 {strides = array<i32>} : memref<1x6x256xf32, #tpu.memory_space<vmem>>, vector<1x2x256xf32>,
    return
  }
  func.func @transform_0(%arg0: i32, %arg1: i32) -> (i32, i32, i32) {
    %c0_i32 = arith.constant 0 : i32
    %c0_i32_0 = arith.constant 0 : i32
    return %arg0, %c0_i32, %arg1 : i32, i32, i32
  }
  func.func @transform_1(%arg0: i32, %arg1: i32) -> (i32, i32, i32) {
    %c0_i32 = arith.constant 0 : i32
    %c0_i32_0 = arith.constant 0 : i32
    return %arg0, %c0_i32, %arg1 : i32, i32, i32
  }
}

</mosaic_0001>

<llo_original>
// kernel: tpu_custom_call.1
$region0: #{tpu_custom_call.1}
  #allocation0 [shape = 'u32[]', space=smem, size = 0x4, offset = 0x4, fixed_abs, tag = 'smem constant byte address 0x4 - core index']
  #allocation1 [shape = 'u32[144,128]{1,0:T(1,128)}', space=vmem, size = 0x12000, scoped, tag = 'internal scratch']
  %s0 = inlined_call_operand.hbm [shape: f32[2,4,256], index: 0, kind: input, shape index: {}]
  %s1 = inlined_call_operand.vmem [shape: f32[2,6,256], index: 1, kind: output, shape index: {}]
  %s2 = sld [smem:[#allocation0]]
  $region41: #{tpu_custom_call.1} parent=0
    _
  %s4 = ssub.s32 1, %s2
  %s5 = scalar_select 0, %s4, %s2
  $region1: #{tpu_custom_call.1} parent=0
    #allocation2 [shape = 'u8[8192]{0}', space=vmem, size = 0x2000, scoped, tag = 'input window, operand 0']
    #allocation3 [shape = 's32[2]{0}', space=sflag, size = 0x8, scoped, tag = 'scoped memory for tpu_custom_call.1']
    %6 = vsyncpa [#allocation3], 0
    %s7 = scalar_lea.sflag [#allocation3], 1
    %8 = vsyncpa %s7, 0
    loop: start=0, step=1, limit=4
    $region2: #{tpu_custom_call.1} parent=1 // loop_pre_header
      _
    $region3: #{tpu_custom_call.1} parent=1 // loop_header
      %s10 = sphi 0, %s14
      %p11 = scmp.ge.s32.totalorder %s10, 4
      %s17 = sphi 0, %s29
      %s18 = sphi 0, %s25
      %s19 = sphi 0, %s17
      %s20 = sphi 0, %s18
      %s21 = sphi 0, %s19
      %s22 = sphi 0, %s20
      %s34 = sphi 0, %s36
      %s37 = sphi 0, %s34
      %s38 = sphi 0, %s37
      %s54 = sphi 0, %s38
      %s62 = sphi 0, %s64
      %s65 = sphi 0, %s62
      %s66 = sphi 0, %s65
      %s82 = sphi 0, %s66
    $region4: #{tpu_custom_call.1} parent=1 // loop_header_branch
      %13 = sbr.rel (%p11) target = $region8
    $region5: #{tpu_custom_call.1} parent=1 // loop_body
      %s15 = ssub.s32 %s10, 1
      %s16 = ssub.s32 %s10, 2
      %s23 = sadd.s32 1, %s18
      %p24 = scmp.ge.s32.totalorder %s23, 1
      %s25 = scalar_select %p24, 0, %s23
      %s26 = sadd.s32 1, %s17
      %s27 = scalar_select %p24, %s26, %s17
      %p28 = scmp.ge.s32.totalorder %s27, 2
      %s29 = scalar_select %p28, 0, %s27
      %s30 = ssub.s32 %s17, %s29
      %s31 = ssub.s32 %s18, %s25
      %s32 = sor.u32 %s30, %s31
      %p33 = scmp.eq.s32.totalorder %s32, 0
      %s35 = sadd.s32 %s34, 1
      %s36 = scalar_select %p33, %s34, %s35
      %p39 = pneg %p33
      %p40 = scmp.eq.s32.totalorder %s10, 1
      %p41 = por %p39, %p40
      %p42 = scmp.ne.s32.totalorder %s34, %s37
      %p43 = scmp.eq.s32.totalorder %s10, 0
      %p44 = por %p42, %p43
      %p45 = scmp.ne.s32.totalorder %s34, %s37
      %p46 = scmp.eq.s32.totalorder %s15, 1
      %p47 = por %p45, %p46
      %p48 = scmp.ne.s32.totalorder %s37, %s38
      %p49 = scmp.eq.s32.totalorder %s15, 0
      %p50 = por %p48, %p49
      %p51 = scmp.ne.s32.totalorder %s37, %s38
      %p52 = scmp.eq.s32.totalorder %s16, 1
      %p53 = por %p51, %p52
      %p55 = scmp.ne.s32.totalorder %s38, %s54
      %p56 = scmp.eq.s32.totalorder %s16, 0
      %p57 = por %p55, %p56
      %s58 = ssub.s32 %s17, %s29
      %s59 = ssub.s32 %s18, %s25
      %s60 = sor.u32 %s58, %s59
      %p61 = scmp.eq.s32.totalorder %s60, 0
      %s63 = sadd.s32 %s62, 1
      %s64 = scalar_select %p61, %s62, %s63
      %p67 = pneg %p61
      %p68 = scmp.eq.s32.totalorder %s10, 1
      %p69 = por %p67, %p68
      %p70 = scmp.ne.s32.totalorder %s62, %s65
      %p71 = scmp.eq.s32.totalorder %s10, 0
      %p72 = por %p70, %p71
      %p73 = scmp.ne.s32.totalorder %s62, %s65
      %p74 = scmp.eq.s32.totalorder %s15, 1
      %p75 = por %p73, %p74
      %p76 = scmp.ne.s32.totalorder %s65, %s66
      %p77 = scmp.eq.s32.totalorder %s15, 0
      %p78 = por %p76, %p77
      %p79 = scmp.ne.s32.totalorder %s65, %s66
      %p80 = scmp.eq.s32.totalorder %s16, 1
      %p81 = por %p79, %p80
      %p83 = scmp.ne.s32.totalorder %s66, %s82
      %p84 = scmp.eq.s32.totalorder %s16, 0
      %p85 = por %p83, %p84
      %p86 = scmp.le.s32.totalorder 1, %s10
      %p87 = scmp.lt.s32.totalorder %s10, 3
      %p88 = pnand %p86, %p87
      %p89 = pneg %p88
      // Predicated region
      $region9: #{tpu_custom_call.1} parent=5 // pred_check
        _
      $region10: #{tpu_custom_call.1} parent=5 // pred_check_branch
        %91 = sbr.rel (%p88) target = $region12
      $region11: #{tpu_custom_call.1} parent=5 // pred_region
        %s92 = ssub.s32 %s10, 1
      $region12: #{tpu_custom_call.1} parent=5 // pred_fallthru
        _
      %p93 = scmp.lt.s32.totalorder %s10, 2
      // Predicated region
      $region13: #{tpu_custom_call.1} parent=5 // pred_check
        %p94 = pneg %p93
      $region14: #{tpu_custom_call.1} parent=5 // pred_check_branch
        %96 = sbr.rel (%p94) target = $region16
      $region15: #{tpu_custom_call.1} parent=5 // pred_region
        // Predicated region
        $region17: #{tpu_custom_call.1} parent=15 // pred_check
          %p97 = pneg %p44
        $region18: #{tpu_custom_call.1} parent=15 // pred_check_branch
          %99 = sbr.rel (%p97) target = $region20
        $region19: #{tpu_custom_call.1} parent=15 // pred_region
          %s100 = sand.u32 %s34, 1
          %s101 = scalar_lea.sflag [#allocation3], %s100
          %s102 = sand.u32 %s34, 1
          %s103 = smul.addr %s102, 8
          %s104 = scalar_lea.vmem [#allocation2], %s103
          %s105 = smul.u32 2, %s18
          %s107 = ssub.s32 128, 128
          %108 = vsyncadd %s101, %s107
          %s109 = smul.addr %s17, 2
          %s110 = sadd.s32 %s105, %s109
          %s111 = smul.addr %s110, 64
          %s112 = scalar_lea.hbm %s0, %s111
          %s114 = sshll.u32 %s104, 4
          %s115 = int_to_ptr.vmem [resolvable:$true] %s114
          %117 = dma.hbm_to_vmem [thread:$0]  %s112, 128, %s115, %s101
        $region20: #{tpu_custom_call.1} parent=15 // pred_fallthru
          _
      $region16: #{tpu_custom_call.1} parent=5 // pred_fallthru
        _
      %p118 = scmp.le.s32.totalorder 1, %s10
      %p119 = scmp.lt.s32.totalorder %s10, 3
      %p120 = pnand %p118, %p119
      %p121 = pneg %p120
      // Predicated region
      $region21: #{tpu_custom_call.1} parent=5 // pred_check
        _
      $region22: #{tpu_custom_call.1} parent=5 // pred_check_branch
        %123 = sbr.rel (%p120) target = $region24
      $region23: #{tpu_custom_call.1} parent=5 // pred_region
        %s124 = ssub.s32 %s10, 1
        %s125 = sand.u32 %s37, 1
        %s126 = scalar_lea.sflag [#allocation3], %s125
        %s127 = sand.u32 %s37, 1
        %s128 = smul.addr %s127, 8
        %s129 = scalar_lea.vmem [#allocation2], %s128
        // Predicated region
        $region25: #{tpu_custom_call.1} parent=23 // pred_check
          %p130 = pneg %p50
        $region26: #{tpu_custom_call.1} parent=23 // pred_check_branch
          %132 = sbr.rel (%p130) target = $region28
        $region27: #{tpu_custom_call.1} parent=23 // pred_region
          %133 = dma.done %s126, 128
        $region28: #{tpu_custom_call.1} parent=23 // pred_fallthru
          _
        %s134 = sand.u32 %s37, 1
        %s135 = scalar_lea.sflag [#allocation3], %s134
        %s136 = sand.u32 %s37, 1
        %s137 = smul.addr %s136, 8
        %s138 = scalar_lea.vmem [#allocation2], %s137
        %p139 = pneg %p50
        %p140 = pneg %p47
        %p141 = pneg %p78
        %p142 = pneg %p75
        %s143 = smul.u32 2, %s20
        %p144 = scmp.lt.s32.totalorder %s19, 1
        %s145 = scalar_select %p144, %s19, 1
        %p146 = scmp.lt.s32.totalorder %s143, 1
        %s147 = scalar_select %p146, %s143, 1
        %s148 = smul.addr %s145, 2
        %s149 = sadd.s32 %s147, %s148
        %s150 = smul.addr %s149, 8
        %s151 = scalar_lea.vmem %s1, %s150
        %s152 = smul.u32 2, %s20
        %s153 = smul.u32 2, %s20
        %p154 = scmp.lt.s32.totalorder %s19, 1
        %s155 = scalar_select %p154, %s19, 1
        %p156 = scmp.lt.s32.totalorder %s153, 1
        %s157 = scalar_select %p156, %s153, 1
        %s158 = smul.addr %s155, 2
        %s159 = sadd.s32 %s157, %s158
        %s160 = smul.addr %s159, 8
        %s161 = scalar_lea.vmem %s1, %s160
        %s162 = smul.u32 2, %s20
        %v163 = vld [vmem:[%s129] sm:$0xff]
        %v165 = vcombine.high %v163, %v163
        %167 = vst [vmem:[%s161] sm:$0xf] %v163
        %168 = vst [vmem:[%s161 + $0x8] sm:$0xf] %v165
        %s169 = smul.u32 %s20, 256
        %v170 = vlaneseq
        %v171 = vand.u32 %v170, 127
        %v172 = vadd.s32 %v171, 128
        %v173 = vstv %s169
        %v174 = vadd.s32 %v173, %v171
        %v175 = vadd.s32 %v173, %v172
        %v176 = vcvt.s32.f32 %v174
        %v177 = vcvt.s32.f32 %v175
        %v178 = vadd.f32 %v176, 0.5
        %v179 = vadd.f32 %v177, 0.5
        %v180 = vrcp.pop 16.0
        %v181 = vmul.f32 %v178, %v180
        %v182 = vmul.f32 %v179, %v180
        %v183 = vcvt.f32.s32.to.zero.pseudo %v181
        %v184 = vcvt.f32.s32.to.zero.pseudo %v182
        %v185 = vmul.u32 %v183, 16
        %v186 = vmul.u32 %v184, 16
        %v187 = vsub.s32 %v174, %v185
        %v188 = vsub.s32 %v175, %v186
        %vm189 = vcmp.lt.s32.totalorder %v187, 0
        %vm190 = vcmp.lt.s32.totalorder %v188, 0
        %v191 = vsub.s32 %v183, 1
        %v192 = vsub.s32 %v184, 1
        %vm193 = vcmp.ge.s32.totalorder %v187, 16
        %vm194 = vcmp.ge.s32.totalorder %v188, 16
        %v195 = vadd.s32 %v183, 1
        %v196 = vadd.s32 %v184, 1
        %v197 = vsel %vm193, %v195, %v183
        %v198 = vsel %vm194, %v196, %v184
        %v199 = vsel %vm189, %v191, %v197
        %v200 = vsel %vm190, %v192, %v198
        %v201 = vadd.s32 %v187, 16
        %v202 = vadd.s32 %v188, 16
        %v203 = vsub.s32 %v187, 16
        %v204 = vsub.s32 %v188, 16
        %v205 = vsel %vm193, %v203, %v187
        %v206 = vsel %vm194, %v204, %v188
        %v207 = vsel %vm189, %v201, %v205
        %v208 = vsel %vm190, %v202, %v206
        %v209 = vcvt.s32.f32 %v199
        %v210 = vcvt.s32.f32 %v200
        %v211 = vmul.f32 %v209, 0.13333334
        %v212 = vmul.f32 %v210, 0.13333334
        %v213 = vsub.f32 %v211, 1.0
        %v214 = vsub.f32 %v212, 1.0
        %v215 = vcvt.s32.f32 %v207
        %v216 = vcvt.s32.f32 %v208
        %v217 = vmul.f32 %v215, 0.13333334
        %v218 = vmul.f32 %v216, 0.13333334
        %v219 = vsub.f32 %v217, 1.0
        %v220 = vsub.f32 %v218, 1.0
        %v221 = vlaneseq
        %v222 = vshrl.u32 %v221, 7
        %vm223 = vcmp.eq.s32.totalorder %v222, 0
        %v224 = vsel %vm223, %v213, %v219
        %v225 = vsel %vm223, %v214, %v220
        %v228 = vrot.slane %v224, 4
        %v229 = vrot.slane %v225, 4
        %232 = vst [vmem:[%s161] sm:$0x30] %v228
        %233 = vst [vmem:[%s161 + $0x8] sm:$0x30] %v229
        %s234 = smul.u32 2, %s20
        %p235 = scmp.lt.s32.totalorder %s19, 1
        %s236 = scalar_select %p235, %s19, 1
        %p237 = scmp.lt.s32.totalorder %s234, 1
        %s238 = scalar_select %p237, %s234, 1
        %s239 = smul.addr %s236, 2
        %s240 = sadd.s32 %s238, %s239
        %s241 = smul.addr %s240, 8
        %s242 = scalar_lea.vmem %s1, %s241
        // Predicated region
        $region29: #{tpu_custom_call.1} parent=23 // pred_check
          %p243 = pneg %p75
        $region30: #{tpu_custom_call.1} parent=23 // pred_check_branch
          %245 = sbr.rel (%p243) target = $region32
        $region31: #{tpu_custom_call.1} parent=23 // pred_region
          %s246 = smul.u32 2, %s20
        $region32: #{tpu_custom_call.1} parent=23 // pred_fallthru
          _
      $region24: #{tpu_custom_call.1} parent=5 // pred_fallthru
        _
      %p247 = scmp.le.s32.totalorder 2, %s10
      // Predicated region
      $region33: #{tpu_custom_call.1} parent=5 // pred_check
        %p248 = pneg %p247
      $region34: #{tpu_custom_call.1} parent=5 // pred_check_branch
        %250 = sbr.rel (%p248) target = $region36
      $region35: #{tpu_custom_call.1} parent=5 // pred_region
        %s251 = ssub.s32 %s10, 2
        // Predicated region
        $region37: #{tpu_custom_call.1} parent=35 // pred_check
          %p252 = pneg %p81
        $region38: #{tpu_custom_call.1} parent=35 // pred_check_branch
          %254 = sbr.rel (%p252) target = $region40
        $region39: #{tpu_custom_call.1} parent=35 // pred_region
          %s255 = smul.u32 2, %s22
          %p256 = scmp.lt.s32.totalorder %s21, 1
          %s257 = scalar_select %p256, %s21, 1
          %p258 = scmp.lt.s32.totalorder %s255, 1
          %s259 = scalar_select %p258, %s255, 1
          %s260 = smul.addr %s257, 2
          %s261 = sadd.s32 %s259, %s260
          %s262 = smul.addr %s261, 8
          %s263 = scalar_lea.vmem %s1, %s262
        $region40: #{tpu_custom_call.1} parent=35 // pred_fallthru
          _
      $region36: #{tpu_custom_call.1} parent=5 // pred_fallthru
        _
    $region6: #{tpu_custom_call.1} parent=1 // loop_footer
      %s14 = sadd.s32 1, %s10
    $region7: #{tpu_custom_call.1} parent=1 // loop_footer_branch
      %9 = sbr.rel target = $region3
    $region8: #{tpu_custom_call.1} parent=1 // loop_exit
      _
    %264 = vsyncpa [#allocation3], 1
    %s265 = scalar_lea.sflag [#allocation3], 1
    %266 = vsyncpa %s265, 1

</llo_original>
